<compile_context>
chip_gen: v6e
topology: v6e:2x2x1
jax: 0.10.0
libtpu: 0.0.40
codegen_flags: <defaults>
</compile_context>

<pallas_src>
import jax
import jax.numpy as jnp
from jax.experimental import pallas as pl
from jax.experimental.pallas import tpu as pltpu

_LANE = 128            # TPU vreg lane width
_VPU_K_THRESHOLD = 16  # below this, skip the MXU and use VPU FMAs


def _linear_kernel(x_ref, w_ref, b_ref, o_ref):
    # x: [B, K]   w: [K, Npad]   b: [1, Npad]   o: [B, Npad]
    x = x_ref[...].astype(jnp.float32)
    w = w_ref[...].astype(jnp.float32)
    b = b_ref[...].astype(jnp.float32)
    k_dim = x.shape[1]

    if k_dim <= _VPU_K_THRESHOLD:
        # Tiny contraction: statically unrolled VPU multiply-adds.
        acc = x[:, 0:1] * w[0:1, :]
        for k in range(1, k_dim):
            acc = acc + x[:, k : k + 1] * w[k : k + 1, :]
    else:
        # Larger K: use the MXU with an fp32 accumulator.
        acc = jnp.dot(x, w, preferred_element_type=jnp.float32)

    o_ref[...] = (acc + b).astype(o_ref.dtype)


def pack_linear_params(weight, bias, lane=_LANE):
    """One-time parameter packing (do NOT call per forward).

    weight: [num_class, input_size] (PyTorch nn.Linear layout)
    bias:   [num_class]
    Returns (w_packed [input_size, Npad], b_packed [1, Npad]) with
    Npad = round_up(num_class, 128) so kernel output stores are lane-dense.
    """
    num_class, input_size = weight.shape
    n_pad = max(lane, ((num_class + lane - 1) // lane) * lane)
    w_packed = (
        jnp.zeros((input_size, n_pad), weight.dtype)
        .at[:, :num_class]
        .set(weight.T)
    )
    b_packed = jnp.zeros((1, n_pad), bias.dtype).at[0, :num_class].set(bias)
    return w_packed, b_packed


def logistic_regression_forward(x, w_packed, b_packed, num_class):
    """x: [B, input_size], w_packed: [input_size, Npad], b_packed: [1, Npad].
    Returns [B, num_class] float32 logits (= x @ W.T + b)."""
    B, in_dim = x.shape
    n_pad = w_packed.shape[1]

    flops = 2 * B * in_dim * n_pad
    bytes_accessed = 4 * (x.size + w_packed.size + b_packed.size + B * n_pad)

    out_padded = pl.pallas_call(
        _linear_kernel,
        out_shape=jax.ShapeDtypeStruct((B, n_pad), jnp.float32),
        in_specs=[
            pl.BlockSpec(memory_space=pltpu.MemorySpace.VMEM),
            pl.BlockSpec(memory_space=pltpu.MemorySpace.VMEM),
            pl.BlockSpec(memory_space=pltpu.MemorySpace.VMEM),
        ],
        out_specs=pl.BlockSpec(memory_space=pltpu.MemorySpace.VMEM),
        cost_estimate=pl.CostEstimate(
            flops=flops, transcendentals=0, bytes_accessed=bytes_accessed
        ),
    )(x, w_packed, b_packed)

    # Cheap XLA slice back to the logical number of classes.
    return out_padded[:, :num_class]


def init_linear_params(key, input_size, num_class):
    """Deterministic init matching nn.Linear's default:
    U(-1/sqrt(in), 1/sqrt(in)) for both weight and bias.
    Weight returned in PyTorch layout [num_class, input_size]."""
    k_w, k_b = jax.random.split(key)
    bound = 1.0 / (input_size ** 0.5)
    weight = jax.random.uniform(
        k_w, (num_class, input_size), minval=-bound, maxval=bound,
        dtype=jnp.float32)
    bias = jax.random.uniform(
        k_b, (num_class,), minval=-bound, maxval=bound, dtype=jnp.float32)
    return weight, bias


if __name__ == "__main__":
    input_size = 2
    num_class = 2

    key = jax.random.PRNGKey(0)
    weight, bias = init_linear_params(key, input_size, num_class)
    # One-time transpose + lane padding (cached layout; never repeated per call).
    w_packed, b_packed = pack_linear_params(weight, bias)

    # Same test points as the reference script (4 samples, 2 features).
    test_in = jnp.array(
        [[20.0, 20.0],
         [50.0, 50.0],
         [100.0, 100.0],
         [60.18259938620976, 86.30855209546826]],
        dtype=jnp.float32)

    out = logistic_regression_forward(test_in, w_packed, b_packed, num_class)
    out = jax.block_until_ready(out)

    # Correctness check against plain JAX reference (PyTorch semantics).
    ref = test_in @ weight.T + bias
    assert out.shape == (4, num_class)
    assert jnp.allclose(out, ref, atol=1e-5, rtol=1e-5), (out, ref)

    print("KERNEL_OK")
</pallas_src>

<mosaic_0001>
module attributes {stable_mosaic.version = 11 : i64} {
  func.func @_linear_kernel(%arg0: memref<4x2xf32, #tpu.memory_space<vmem>>, %arg1: memref<2x128xf32, #tpu.memory_space<vmem>>, %arg2: memref<1x128xf32, #tpu.memory_space<vmem>>, %arg3: memref<4x128xf32, #tpu.memory_space<vmem>>) attributes {dimension_semantics = [], scalar_prefetch = 0 : i64, scratch_operands = 0 : i64, tpu.core_type = #tpu.core_type<tc>} {
    %c0 = arith.constant 0 : index
    %c0_0 = arith.constant 0 : index
    %0 = vector.load %arg0[%c0, %c0_0] : memref<4x2xf32, #tpu.memory_space<vmem>>, vector<4x2xf32>
    %c0_1 = arith.constant 0 : index
    %c0_2 = arith.constant 0 : index
    %1 = vector.load %arg1[%c0_1, %c0_2] : memref<2x128xf32, #tpu.memory_space<vmem>>, vector<2x128xf32>
    %c0_3 = arith.constant 0 : index
    %c0_4 = arith.constant 0 : index
    %2 = vector.load %arg2[%c0_3, %c0_4] : memref<1x128xf32, #tpu.memory_space<vmem>>, vector<1x128xf32>
    %3 = vector.extract_strided_slice %0 {offsets = [0, 0], sizes = [4, 1], strides = [1, 1]} : vector<4x2xf32> to vector<4x1xf32>
    %4 = vector.extract_strided_slice %1 {offsets = [0, 0], sizes = [1, 128], strides = [1, 1]} : vector<2x128xf32> to vector<1x128xf32>
    %5 = vector.broadcast %3 : vector<4x1xf32> to vector<4x128xf32>
    %6 = vector.broadcast %4 : vector<1x128xf32> to vector<4x128xf32>
    %7 = arith.mulf %5, %6 : vector<4x128xf32>
    %8 = vector.extract_strided_slice %0 {offsets = [0, 1], sizes = [4, 1], strides = [1, 1]} : vector<4x2xf32> to vector<4x1xf32>
    %9 = vector.extract_strided_slice %1 {offsets = [1, 0], sizes = [1, 128], strides = [1, 1]} : vector<2x128xf32> to vector<1x128xf32>
    %10 = vector.broadcast %8 : vector<4x1xf32> to vector<4x128xf32>
    %11 = vector.broadcast %9 : vector<1x128xf32> to vector<4x128xf32>
    %12 = arith.mulf %10, %11 : vector<4x128xf32>
    %13 = arith.addf %7, %12 : vector<4x128xf32>
    %14 = vector.broadcast %2 : vector<1x128xf32> to vector<4x128xf32>
    %15 = arith.addf %13, %14 : vector<4x128xf32>
    %c0_5 = arith.constant 0 : index
    %c0_6 = arith.constant 0 : index
    %16 = vector.load %arg3[%c0_5, %c0_6] : memref<4x128xf32, #tpu.memory_space<vmem>>, vector<4x128xf32>
    tpu.vector_store %arg3[%c0_5, %c0_6], %15 {strides = array<i32>} : memref<4x128xf32, #tpu.memory_space<vmem>>, vector<4x128xf32>,
    return
  }
}

</mosaic_0001>

<llo_original>
// kernel: tpu_custom_call.1
$region0: #{tpu_custom_call.1}
  #allocation0 [shape = 'u32[]', space=smem, size = 0x4, offset = 0x4, fixed_abs, tag = 'smem constant byte address 0x4 - core index']
  #allocation1 [shape = 'u32[144,128]{1,0:T(1,128)}', space=vmem, size = 0x12000, scoped, tag = 'internal scratch']
  %s0 = inlined_call_operand.vmem [shape: f32[4,2], index: 0, kind: input, shape index: {}]
  %s1 = inlined_call_operand.vmem [shape: f32[2,128], index: 1, kind: input, shape index: {}]
  %s2 = inlined_call_operand.vmem [shape: f32[1,128], index: 2, kind: input, shape index: {}]
  %s3 = inlined_call_operand.hbm [shape: f32[4,128], index: 3, kind: output, shape index: {}]
  %s4 = sld [smem:[#allocation0]]
  $region22: #{tpu_custom_call.1} parent=0
    _
  %s6 = ssub.s32 1, %s4
  %s7 = scalar_select 0, %s6, %s4
  $region1: #{tpu_custom_call.1} parent=0
    #allocation2 [shape = 'u8[2048]{0}', space=vmem, size = 0x800, scoped, tag = 'output window, operand 0, single buffered']
    #allocation3 [shape = 's32[1]{0}', space=sflag, size = 0x4, scoped, tag = 'scoped memory for tpu_custom_call.1']
    %8 = vsyncpa [#allocation3], 0
    // Predicated region
    $region2: #{tpu_custom_call.1} parent=1 // pred_check
      _
    $region3: #{tpu_custom_call.1} parent=1 // pred_check_branch
      %10 = sbr.rel (0) target = $region5
    $region4: #{tpu_custom_call.1} parent=1 // pred_region
      _
    $region5: #{tpu_custom_call.1} parent=1 // pred_fallthru
      _
    // Predicated region
    $region6: #{tpu_custom_call.1} parent=1 // pred_check
      _
    $region7: #{tpu_custom_call.1} parent=1 // pred_check_branch
      %12 = sbr.rel (0) target = $region9
    $region8: #{tpu_custom_call.1} parent=1 // pred_region
      _
    $region9: #{tpu_custom_call.1} parent=1 // pred_fallthru
      _
    // Predicated region
    $region10: #{tpu_custom_call.1} parent=1 // pred_check
      _
    $region11: #{tpu_custom_call.1} parent=1 // pred_check_branch
      %14 = sbr.rel (0) target = $region13
    $region12: #{tpu_custom_call.1} parent=1 // pred_region
      _
    $region13: #{tpu_custom_call.1} parent=1 // pred_fallthru
      _
    %v15 = vld [vmem:[%s0] sm:$0xf]
    %v16 = vld [vmem:[%s1] sm:$0x3]
    %v17 = vld [vmem:[%s2] sm:$0x1]
    %19 = vset.pattern.permute.xlu0 0
    %20 = vperm.xlu0 %19, %v15
    %v21 = vpop.permute.xlu0 %20
    %v23 = vlaneseq
    %v24 = vshrl.u32 %v23, 7
    %v25 = vsub.s32 0, %v24
    %v26 = vrot.slane %v16, %v25
    %v27 = vmul.f32 %v21, %v26
    %28 = vset.pattern.permute.xlu0 1
    %29 = vperm.xlu0 %28, %v15
    %v30 = vpop.permute.xlu0 %29
    %v32 = vlaneseq
    %v33 = vshrl.u32 %v32, 7
    %v34 = vsub.s32 1, %v33
    %v35 = vrot.slane %v16, %v34
    %v36 = vmul.f32 %v30, %v35
    %v37 = vadd.f32 %v27, %v36
    %v39 = vlaneseq
    %v40 = vshrl.u32 %v39, 7
    %v41 = vsub.s32 0, %v40
    %v42 = vrot.slane %v17, %v41
    %v44 = vadd.f32 %v37, %v42
    %45 = vst [vmem:[#allocation2] sm:$0xf] %v44
    // Predicated region
    $region14: #{tpu_custom_call.1} parent=1 // pred_check
      _
    $region15: #{tpu_custom_call.1} parent=1 // pred_check_branch
      %47 = sbr.rel (0) target = $region17
    $region16: #{tpu_custom_call.1} parent=1 // pred_region
      %s49 = ssub.s32 64, 64
      %50 = vsyncadd [#allocation3], %s49
      %s52 = sshll.u32 [#allocation2], 4
      %s53 = int_to_ptr.vmem [resolvable:$true] %s52
      %55 = dma.vmem_to_hbm [thread:$0]  %s53, 64, %s3, [#allocation3]
    $region17: #{tpu_custom_call.1} parent=1 // pred_fallthru
      _
    // Predicated region
    $region18: #{tpu_custom_call.1} parent=1 // pred_check
      _
    $region19: #{tpu_custom_call.1} parent=1 // pred_check_branch
      %57 = sbr.rel (0) target = $region21
    $region20: #{tpu_custom_call.1} parent=1 // pred_region
      %58 = dma.done [#allocation3], 64
    $region21: #{tpu_custom_call.1} parent=1 // pred_fallthru
      _
    %59 = vsyncpa [#allocation3], 1

</llo_original>
